<compile_context>
chip_gen: v6e
topology: v6e:2x2x1
jax: 0.10.0
libtpu: 0.0.40
codegen_flags: <defaults>
</compile_context>

<pallas_src>
import math
import jax
import jax.numpy as jnp
from jax.experimental import pallas as pl
from jax.experimental.pallas import tpu as pltpu


# ---------------------------------------------------------------------------
# Rs handling (plain Python glue, mirrors o3.simplify semantics minimally)
# ---------------------------------------------------------------------------
def simplify_Rs(Rs):
    """Merge consecutive entries with identical (l, p); drop mul==0 entries."""
    out = []
    for mul, l, p in Rs:
        if mul == 0:
            continue
        if out and out[-1][1] == l and out[-1][2] == p:
            out[-1] = (out[-1][0] + mul, l, p)
        else:
            out.append((mul, l, p))
    return [tuple(x) for x in out]


def dim_Rs(Rs):
    return sum(mul * (2 * l + 1) for mul, l, _ in Rs)


# ---------------------------------------------------------------------------
# Pallas kernel: identity copy (only used when a materialized copy is wanted)
# ---------------------------------------------------------------------------
def _identity_copy_kernel(x_ref, o_ref):
    o_ref[...] = x_ref[...]


_LANES = 8 * 128  # 1024: one f32 vreg-row-block worth of lanes -> unmasked full-width stores


def identity_copy_pallas(x, tile_rows=512):
    """Materializing identity (explicit copy) through a lane-dense, row-tiled Pallas kernel."""
    flat = x.reshape(-1)
    total = flat.size
    if total == 0:
        return x

    if total % _LANES == 0:
        # Lane-dense tiled path: [rows, 1024], block = (tile_rows, 1024) ~ 2 MiB f32.
        rows = total // _LANES
        x2d = flat.reshape(rows, _LANES)
        tr = min(int(tile_rows), rows)
        if tr < rows and tr % 8 != 0:
            tr = max(8, (tr // 8) * 8)  # keep sublane dim a multiple of 8 for partial blocks
        grid = (pl.cdiv(rows, tr),)
        y2d = pl.pallas_call(
            _identity_copy_kernel,
            out_shape=jax.ShapeDtypeStruct((rows, _LANES), x.dtype),
            grid_spec=pl.GridSpec(
                grid=grid,
                in_specs=[pl.BlockSpec((tr, _LANES), lambda i: (i, 0))],
                out_specs=pl.BlockSpec((tr, _LANES), lambda i: (i, 0)),
            ),
            input_output_aliases={0: 0},
            compiler_params=pltpu.CompilerParams(
                dimension_semantics=("parallel",)  # lets v7x shard tiles across both TCs
            ),
        )(x2d)
        return y2d.reshape(x.shape)

    # Fallback for small / oddly-sized tensors (e.g. last dim 15): single full-array block.
    x2d = flat.reshape(1, total)
    y2d = pl.pallas_call(
        _identity_copy_kernel,
        out_shape=jax.ShapeDtypeStruct((1, total), x.dtype),
        grid_spec=pl.GridSpec(
            grid=(1,),
            in_specs=[pl.BlockSpec((1, total), lambda i: (0, 0))],
            out_specs=pl.BlockSpec((1, total), lambda i: (0, 0)),
        ),
        input_output_aliases={0: 0},
        compiler_params=pltpu.CompilerParams(dimension_semantics=("arbitrary",)),
    )(x2d)
    return y2d.reshape(x.shape)


# ---------------------------------------------------------------------------
# Module equivalent
# ---------------------------------------------------------------------------
class IdentityPallas:
    def __init__(self, Rs_in, Rs_out):
        self.Rs_in = simplify_Rs(Rs_in)
        self.Rs_out = simplify_Rs(Rs_out)
        assert self.Rs_in == self.Rs_out
        # output_mask buffer: ones of length dim(Rs_out), as in the PyTorch __init__.
        self.output_mask = jnp.concatenate(
            [jnp.ones(mul * (2 * l + 1), dtype=jnp.float32) for mul, l, p in self.Rs_out]
        )

    def __call__(self, features, materialize=False):
        """
        :param features: [..., dim(Rs_in)]
        :return: [..., dim(Rs_out)]
        """
        d = dim_Rs(self.Rs_in)
        assert features.shape[-1] == d
        if not materialize:
            # True identity: zero HBM traffic and no kernel launch (matches PyTorch `return features`).
            return features
        # Optional explicit copy through the Pallas kernel.
        return identity_copy_pallas(features)


# ---------------------------------------------------------------------------
# Demo
# ---------------------------------------------------------------------------
if __name__ == "__main__":
    # Rs = 4x l=0 (+1), 2x l=1 (-1), 1x l=2 (+1)  ->  dim = 4*1 + 2*3 + 1*5 = 15
    Rs = [(4, 0, 1), (2, 1, -1), (1, 2, 1)]
    module = IdentityPallas(Rs, Rs)

    key = jax.random.PRNGKey(0)
    batch, nodes = 2, 8
    d = dim_Rs(module.Rs_in)
    features = jax.random.normal(key, (batch, nodes, d), dtype=jnp.float32)

    # 1) Hot path: pure passthrough (the actual forward semantics).
    out = jax.block_until_ready(module(features))
    assert out.shape == features.shape
    assert out.dtype == features.dtype
    assert bool(jnp.all(out == features))

    # 2) Pallas copy kernel on the module's own (small, odd last-dim) features -> fallback path.
    out_copy = jax.block_until_ready(module(features, materialize=True))
    assert out_copy.shape == features.shape
    assert out_copy.dtype == features.dtype
    assert bool(jnp.all(out_copy == features))

    # 3) Pallas copy kernel on a lane-dense tensor -> tiled, pipelined, parallel grid path.
    x = jax.random.normal(jax.random.PRNGKey(1), (40, 1024), dtype=jnp.float32)
    y = jax.block_until_ready(identity_copy_pallas(x, tile_rows=8))  # grid=(5,)
    assert y.shape == x.shape
    assert bool(jnp.all(y == x))

    assert module.output_mask.shape == (d,)

    print("KERNEL_OK")
</pallas_src>

<mosaic_0001>
module attributes {stable_mosaic.version = 11 : i64} {
  func.func @_identity_copy_kernel(%arg0: i32, %arg1: memref<1x240xf32, #tpu.memory_space<vmem>>, %arg2: memref<1x240xf32, #tpu.memory_space<vmem>>) attributes {dimension_semantics = [#tpu.dimension_semantics<arbitrary>], iteration_bounds = array<i64: 1>, scalar_prefetch = 0 : i64, scratch_operands = 0 : i64, tpu.core_type = #tpu.core_type<tc>, window_params = [{pipeline_mode = #tpu.pipeline_mode<synchronous>, transform_indices = @transform_0, window_bounds = array<i64: 1, 240>}, {pipeline_mode = #tpu.pipeline_mode<synchronous>, transform_indices = @transform_1, window_bounds = array<i64: 1, 240>}]} {
    %c0 = arith.constant 0 : index
    %c0_0 = arith.constant 0 : index
    %0 = vector.load %arg1[%c0, %c0_0] : memref<1x240xf32, #tpu.memory_space<vmem>>, vector<1x240xf32>
    %c0_1 = arith.constant 0 : index
    %c0_2 = arith.constant 0 : index
    %1 = vector.load %arg2[%c0_1, %c0_2] : memref<1x240xf32, #tpu.memory_space<vmem>>, vector<1x240xf32>
    tpu.vector_store %arg2[%c0_1, %c0_2], %0 {strides = array<i32>} : memref<1x240xf32, #tpu.memory_space<vmem>>, vector<1x240xf32>,
    return
  }
  func.func @transform_0(%arg0: i32) -> (i32, i32) {
    %c0_i32 = arith.constant 0 : i32
    %c0_i32_0 = arith.constant 0 : i32
    %c0_i32_1 = arith.constant 0 : i32
    return %c0_i32, %c0_i32_0 : i32, i32
  }
  func.func @transform_1(%arg0: i32) -> (i32, i32) {
    %c0_i32 = arith.constant 0 : i32
    %c0_i32_0 = arith.constant 0 : i32
    %c0_i32_1 = arith.constant 0 : i32
    return %c0_i32, %c0_i32_0 : i32, i32
  }
}

</mosaic_0001>

<llo_original>
// kernel: tpu_custom_call.1
$region0: #{tpu_custom_call.1}
  #allocation0 [shape = 'u32[]', space=smem, size = 0x4, offset = 0x4, fixed_abs, tag = 'smem constant byte address 0x4 - core index']
  #allocation1 [shape = 'u32[144,128]{1,0:T(1,128)}', space=vmem, size = 0x12000, scoped, tag = 'internal scratch']
  %s0 = inlined_call_operand.hbm [shape: f32[1,240], index: 0, kind: input, shape index: {}, may-alias: {0,1}]
  %s1 = inlined_call_operand.hbm [shape: f32[1,240], index: 1, kind: output, shape index: {}, may-alias: {0,1}]
  %s2 = sld [smem:[#allocation0]]
  $region18: #{tpu_custom_call.1} parent=0
    _
  %s4 = ssub.s32 1, %s2
  %s5 = scalar_select 0, %s4, %s2
  $region1: #{tpu_custom_call.1} parent=0
    #allocation2 [shape = 'u8[1024]{0}', space=vmem, size = 0x400, scoped, tag = 'input window, operand 0, single buffered']
    #allocation3 [shape = 's32[1]{0}', space=sflag, size = 0x4, scoped, tag = 'scoped memory for tpu_custom_call.1']
    #allocation4 [shape = 's32[1]{0}', space=sflag, size = 0x4, scoped, tag = 'scoped memory for tpu_custom_call.1']
    #allocation5 [shape = 'u8[1024]{0}', space=vmem, size = 0x400, scoped, tag = 'output window, operand 0, single buffered']
    %6 = vsyncpa [#allocation3], 0
    %7 = vsyncpa [#allocation4], 0
    // Predicated region
    $region2: #{tpu_custom_call.1} parent=1 // pred_check
      _
    $region3: #{tpu_custom_call.1} parent=1 // pred_check_branch
      %9 = sbr.rel (0) target = $region5
    $region4: #{tpu_custom_call.1} parent=1 // pred_region
      %s11 = ssub.s32 32, 32
      %12 = vsyncadd [#allocation3], %s11
      %s14 = sshll.u32 [#allocation2], 4
      %s15 = int_to_ptr.vmem [resolvable:$true] %s14
      %17 = dma.hbm_to_vmem [thread:$0]  %s0, 32, %s15, [#allocation3]
    $region5: #{tpu_custom_call.1} parent=1 // pred_fallthru
      _
    // Predicated region
    $region6: #{tpu_custom_call.1} parent=1 // pred_check
      _
    $region7: #{tpu_custom_call.1} parent=1 // pred_check_branch
      %19 = sbr.rel (0) target = $region9
    $region8: #{tpu_custom_call.1} parent=1 // pred_region
      %20 = dma.done [#allocation3], 32
    $region9: #{tpu_custom_call.1} parent=1 // pred_fallthru
      _
    %v21 = vld [vmem:[#allocation2] sm:$0x3]
    %v22 = vlaneseq
    %vm23 = vcmp.ge.s32.totalorder %v22, 0
    %vm24 = vcmp.lt.s32.totalorder %v22, 240
    %vm25 = vmand %vm23, %vm24
    %26 = vst.msk [vmem:[#allocation5] sm:$0x3] %vm25, %v21
    // Predicated region
    $region10: #{tpu_custom_call.1} parent=1 // pred_check
      _
    $region11: #{tpu_custom_call.1} parent=1 // pred_check_branch
      %28 = sbr.rel (0) target = $region13
    $region12: #{tpu_custom_call.1} parent=1 // pred_region
      %s30 = ssub.s32 32, 32
      %31 = vsyncadd [#allocation4], %s30
      %s33 = sshll.u32 [#allocation5], 4
      %s34 = int_to_ptr.vmem [resolvable:$true] %s33
      %36 = dma.vmem_to_hbm [thread:$0]  %s34, 32, %s1, [#allocation4]
    $region13: #{tpu_custom_call.1} parent=1 // pred_fallthru
      _
    // Predicated region
    $region14: #{tpu_custom_call.1} parent=1 // pred_check
      _
    $region15: #{tpu_custom_call.1} parent=1 // pred_check_branch
      %38 = sbr.rel (0) target = $region17
    $region16: #{tpu_custom_call.1} parent=1 // pred_region
      %39 = dma.done [#allocation4], 32
    $region17: #{tpu_custom_call.1} parent=1 // pred_fallthru
      _
    %40 = vsyncpa [#allocation3], 1
    %41 = vsyncpa [#allocation4], 1

</llo_original>
